<compile_context>
chip_gen: v6e
topology: v6e:2x2x1
jax: 0.10.0
libtpu: 0.0.40
codegen_flags: <defaults>
</compile_context>

<pallas_src>
import jax
import jax.numpy as jnp
from jax.experimental import pallas as pl
from jax.experimental.pallas import tpu as pltpu

NUM_MODELS = 3
FEAT_DIMS = (64, 64, 32)   # stand-ins for (2048, 2048, 1024) feature widths at small scale
F_ALIGN = 256              # pad TOTAL feature width to a 256-wide MXU pass (v6e/v7x); 2x128 on v5e
NC_ALIGN = 128             # lane-dense padded class dim


def _round_up(x, m):
    return ((x + m - 1) // m) * m


def _ensemble_head_kernel(pooled_ref, w1_ref, b1_ref, w2_ref, b2_ref, o_ref):
    """Fused ensemble for one batch tile:
         feat = relu(pooled @ W1_cat + b1_cat)      # all members in one matmul
         out  = feat @ (W2_stack/M) + (sum_m b2_m)/M  # stacked W2 => member sum; 1/M pre-folded
    Dropout(0.5) is identity in eval mode.
    """
    feat = jnp.dot(pooled_ref[...], w1_ref[...],
                   preferred_element_type=jnp.float32)            # (TB, F_TOT) f32 on MXU
    feat = jnp.maximum(feat + b1_ref[...], 0.0)                   # bias + ReLU in f32 (VPU)
    o_ref[...] = jnp.dot(feat.astype(w2_ref.dtype), w2_ref[...],
                         preferred_element_type=jnp.float32) + b2_ref[...]


def pack_params(raw_params):
    """Concatenate per-member W1/b1 along features at RAW widths, stack W2
    vertically, pad the TOTAL feature dim to F_ALIGN and classes to NC_ALIGN,
    sum b2, and fold the 1/M ensemble-mean scale into W2/b2 (exact zero padding)."""
    m = len(raw_params)
    nc = raw_params[0][3].shape[0]
    f_raw = sum(w1.shape[1] for (w1, _, _, _) in raw_params)      # 64+64+32 = 160
    f_tot = _round_up(f_raw, F_ALIGN)                             # -> 256
    nc_pad = _round_up(nc, NC_ALIGN)                              # -> 128

    w1_cat = jnp.concatenate([p[0] for p in raw_params], axis=1)  # (C, f_raw)
    b1_cat = jnp.concatenate([p[1] for p in raw_params], axis=0)  # (f_raw,)
    w2_cat = jnp.concatenate([p[2] for p in raw_params], axis=0)  # (f_raw, nc)
    b2_sum = sum(p[3] for p in raw_params)                        # (nc,)

    w1_cat = jnp.pad(w1_cat, ((0, 0), (0, f_tot - f_raw)))
    b1_cat = jnp.pad(b1_cat, ((0, f_tot - f_raw),))
    w2_cat = jnp.pad(w2_cat, ((0, f_tot - f_raw), (0, nc_pad - nc)))
    b2_sum = jnp.pad(b2_sum, ((0, nc_pad - nc),))

    inv_m = 1.0 / m                                               # fold ensemble mean here
    w1_cat = w1_cat.astype(jnp.bfloat16)                          # (C, f_tot)
    b1_cat = b1_cat[None, :].astype(jnp.float32)                  # (1, f_tot)
    w2_cat = (w2_cat * inv_m).astype(jnp.bfloat16)                # (f_tot, nc_pad)
    b2_sum = (b2_sum * inv_m)[None, :].astype(jnp.float32)        # (1, nc_pad)
    return w1_cat, b1_cat, w2_cat, b2_sum


def ensemble_forward(x_nchw, packed_params, num_classes):
    """x_nchw: (B, C, H, W) float32 -> (B, num_classes) float32."""
    w1_cat, b1_cat, w2_cat, b2_sum = packed_params
    B, C = x_nchw.shape[0], x_nchw.shape[1]
    f_tot = w1_cat.shape[1]
    nc_pad = w2_cat.shape[1]

    # Global average pool hoisted out of the kernel: directly on NCHW, no transpose.
    pooled = jnp.mean(x_nchw, axis=(2, 3)).astype(jnp.bfloat16)   # (B, C)

    # Batch padded to a sublane multiple; aim for >=2 tiles (v7x: 2 TCs) while
    # keeping tiles large (v5e/v6e single-TC: fewer, bigger steps), cap 256 rows.
    b_pad = _round_up(B, 8)
    tb = min(256, max(8, _round_up(-(-b_pad // 2), 8)))
    b_pad = _round_up(b_pad, tb)                                  # no ragged edge blocks
    if b_pad != B:
        pooled = jnp.pad(pooled, ((0, b_pad - B), (0, 0)))
    grid = (b_pad // tb,)

    flops = 2 * b_pad * C * f_tot + 2 * b_pad * f_tot * nc_pad
    bytes_accessed = (pooled.size * 2                              # bf16 activations in
                      + w1_cat.size * 2 + w2_cat.size * 2          # bf16 weights
                      + b1_cat.size * 4 + b2_sum.size * 4          # f32 biases
                      + b_pad * nc_pad * 4)                        # f32 out

    out_pad = pl.pallas_call(
        _ensemble_head_kernel,
        out_shape=jax.ShapeDtypeStruct((b_pad, nc_pad), jnp.float32),
        grid_spec=pltpu.PrefetchScalarGridSpec(
            num_scalar_prefetch=0,
            grid=grid,
            in_specs=[
                # pooled activations: batch-tiled, auto-pipelined
                pl.BlockSpec((tb, C), lambda i: (i, 0)),
                # grid-invariant weights/biases: staged once, whole-array in VMEM
                pl.BlockSpec(memory_space=pltpu.MemorySpace.VMEM),  # W1_cat
                pl.BlockSpec(memory_space=pltpu.MemorySpace.VMEM),  # b1_cat
                pl.BlockSpec(memory_space=pltpu.MemorySpace.VMEM),  # W2_stack (pre-scaled 1/M)
                pl.BlockSpec(memory_space=pltpu.MemorySpace.VMEM),  # b2_sum   (pre-scaled 1/M)
            ],
            out_specs=pl.BlockSpec((tb, nc_pad), lambda i: (i, 0)),
        ),
        compiler_params=pltpu.CompilerParams(
            dimension_semantics=("parallel",),
            vmem_limit_bytes=48 * 1024 * 1024,   # headroom for real-scale weights, < v7x 64 MiB
        ),
        cost_estimate=pl.CostEstimate(
            flops=flops, transcendentals=0, bytes_accessed=bytes_accessed),
    )(pooled, w1_cat, b1_cat, w2_cat, b2_sum)

    return out_pad[:B, :num_classes]


def make_params(key, c_in, num_classes):
    """Deterministic synthetic per-member weights in natural (unpadded) shapes."""
    ks = jax.random.split(key, 4 * NUM_MODELS)
    raw = []
    for i, fm in enumerate(FEAT_DIMS):
        k1, k2, k3, k4 = ks[4 * i:4 * i + 4]
        w1 = jax.random.normal(k1, (c_in, fm), jnp.float32) * 0.1
        b1 = jax.random.normal(k2, (fm,), jnp.float32) * 0.1
        w2 = jax.random.normal(k3, (fm, num_classes), jnp.float32) * 0.1
        b2 = jax.random.normal(k4, (num_classes,), jnp.float32) * 0.1
        raw.append((w1, b1, w2, b2))
    return raw


def reference_forward(x_nchw, raw_params):
    """Pure-JAX reference of the same math (per-member loop, then ensemble mean)."""
    pooled = jnp.mean(x_nchw, axis=(2, 3)).astype(jnp.bfloat16)
    outs = []
    for (w1, b1, w2, b2) in raw_params:
        feat = jnp.dot(pooled, w1.astype(jnp.bfloat16),
                       preferred_element_type=jnp.float32) + b1[None, :]
        feat = jnp.maximum(feat, 0.0)
        logits = jnp.dot(feat.astype(jnp.bfloat16), w2.astype(jnp.bfloat16),
                         preferred_element_type=jnp.float32) + b2[None, :]
        outs.append(logits)
    return jnp.mean(jnp.stack(outs), axis=0)


if __name__ == "__main__":
    key = jax.random.PRNGKey(0)
    k_x, k_p = jax.random.split(key)

    B, C, H, W = 2, 4, 16, 16
    num_classes = 4

    x = jax.random.normal(k_x, (B, C, H, W), jnp.float32)
    raw_params = make_params(k_p, C, num_classes)
    packed = pack_params(raw_params)

    fwd = jax.jit(ensemble_forward, static_argnums=2)
    out = jax.block_until_ready(fwd(x, packed, num_classes))

    ref = reference_forward(x, raw_params)
    assert out.shape == (B, num_classes)
    # Slightly looser atol than before: folding 1/M into the bf16 W2 at pack
    # time adds one bf16 rounding of the weights (well under bf16 noise floor).
    assert jnp.allclose(out, ref, atol=5e-4, rtol=5e-3), (out, ref)

    print("KERNEL_OK")
</pallas_src>

<mosaic_0001>
module attributes {stable_mosaic.version = 11 : i64} {
  func.func @_ensemble_head_kernel(%arg0: i32, %arg1: memref<8x4xbf16, #tpu.memory_space<vmem>>, %arg2: memref<4x256xbf16, #tpu.memory_space<vmem>>, %arg3: memref<1x256xf32, #tpu.memory_space<vmem>>, %arg4: memref<256x128xbf16, #tpu.memory_space<vmem>>, %arg5: memref<1x128xf32, #tpu.memory_space<vmem>>, %arg6: memref<8x128xf32, #tpu.memory_space<vmem>>) attributes {dimension_semantics = [#tpu.dimension_semantics<parallel>], iteration_bounds = array<i64: 1>, scalar_prefetch = 0 : i64, scratch_operands = 0 : i64, tpu.core_type = #tpu.core_type<tc>, window_params = [{transform_indices = @transform_0, window_bounds = array<i64: 8, 4>}, {pipeline_mode = #tpu.pipeline_mode<synchronous>, transform_indices = @transform_1, window_bounds = array<i64: 4, 256>}, {pipeline_mode = #tpu.pipeline_mode<synchronous>, transform_indices = @transform_2, window_bounds = array<i64: 1, 256>}, {pipeline_mode = #tpu.pipeline_mode<synchronous>, transform_indices = @transform_3, window_bounds = array<i64: 256, 128>}, {pipeline_mode = #tpu.pipeline_mode<synchronous>, transform_indices = @transform_4, window_bounds = array<i64: 1, 128>}, {transform_indices = @transform_5, window_bounds = array<i64: 8, 128>}]} {
    %c0 = arith.constant 0 : index
    %c0_0 = arith.constant 0 : index
    %0 = vector.load %arg1[%c0, %c0_0] : memref<8x4xbf16, #tpu.memory_space<vmem>>, vector<8x4xbf16>
    %c0_1 = arith.constant 0 : index
    %c0_2 = arith.constant 0 : index
    %1 = vector.load %arg2[%c0_1, %c0_2] : memref<4x256xbf16, #tpu.memory_space<vmem>>, vector<4x256xbf16>
    %cst = arith.constant dense<0.000000e+00> : vector<8x256xf32>
    %2 = tpu.matmul %0, %1, %cst {dimension_numbers = #tpu.dot_dimension_numbers<[1], [0], [0], [1], [0, 0, 1, 1], [], []>} : vector<8x4xbf16>, vector<4x256xbf16>, vector<8x256xf32> -> vector<8x256xf32>
    %c0_3 = arith.constant 0 : index
    %c0_4 = arith.constant 0 : index
    %3 = vector.load %arg3[%c0_3, %c0_4] : memref<1x256xf32, #tpu.memory_space<vmem>>, vector<1x256xf32>
    %4 = vector.broadcast %3 : vector<1x256xf32> to vector<8x256xf32>
    %5 = arith.addf %2, %4 : vector<8x256xf32>
    %cst_5 = arith.constant 0.000000e+00 : f32
    %6 = vector.broadcast %cst_5 : f32 to vector<8x256xf32>
    %7 = arith.maximumf %5, %6 : vector<8x256xf32>
    %8 = arith.truncf %7 : vector<8x256xf32> to vector<8x256xbf16>
    %c0_6 = arith.constant 0 : index
    %c0_7 = arith.constant 0 : index
    %9 = vector.load %arg4[%c0_6, %c0_7] : memref<256x128xbf16, #tpu.memory_space<vmem>>, vector<256x128xbf16>
    %cst_8 = arith.constant dense<0.000000e+00> : vector<8x128xf32>
    %10 = tpu.matmul %8, %9, %cst_8 {dimension_numbers = #tpu.dot_dimension_numbers<[1], [0], [0], [1], [0, 0, 1, 1], [], []>} : vector<8x256xbf16>, vector<256x128xbf16>, vector<8x128xf32> -> vector<8x128xf32>
    %c0_9 = arith.constant 0 : index
    %c0_10 = arith.constant 0 : index
    %11 = vector.load %arg5[%c0_9, %c0_10] : memref<1x128xf32, #tpu.memory_space<vmem>>, vector<1x128xf32>
    %12 = vector.broadcast %11 : vector<1x128xf32> to vector<8x128xf32>
    %13 = arith.addf %10, %12 : vector<8x128xf32>
    %c0_11 = arith.constant 0 : index
    %c0_12 = arith.constant 0 : index
    %14 = vector.load %arg6[%c0_11, %c0_12] : memref<8x128xf32, #tpu.memory_space<vmem>>, vector<8x128xf32>
    tpu.vector_store %arg6[%c0_11, %c0_12], %13 {strides = array<i32>} : memref<8x128xf32, #tpu.memory_space<vmem>>, vector<8x128xf32>,
    return
  }
  func.func @transform_0(%arg0: i32) -> (i32, i32) {
    %c0_i32 = arith.constant 0 : i32
    %c0_i32_0 = arith.constant 0 : i32
    return %arg0, %c0_i32 : i32, i32
  }
  func.func @transform_1(%arg0: i32) -> (i32, i32) {
    %c0_i32 = arith.constant 0 : i32
    %c0_i32_0 = arith.constant 0 : i32
    %c0_i32_1 = arith.constant 0 : i32
    return %c0_i32, %c0_i32_0 : i32, i32
  }
  func.func @transform_2(%arg0: i32) -> (i32, i32) {
    %c0_i32 = arith.constant 0 : i32
    %c0_i32_0 = arith.constant 0 : i32
    %c0_i32_1 = arith.constant 0 : i32
    return %c0_i32, %c0_i32_0 : i32, i32
  }
  func.func @transform_3(%arg0: i32) -> (i32, i32) {
    %c0_i32 = arith.constant 0 : i32
    %c0_i32_0 = arith.constant 0 : i32
    %c0_i32_1 = arith.constant 0 : i32
    return %c0_i32, %c0_i32_0 : i32, i32
  }
  func.func @transform_4(%arg0: i32) -> (i32, i32) {
    %c0_i32 = arith.constant 0 : i32
    %c0_i32_0 = arith.constant 0 : i32
    %c0_i32_1 = arith.constant 0 : i32
    return %c0_i32, %c0_i32_0 : i32, i32
  }
  func.func @transform_5(%arg0: i32) -> (i32, i32) {
    %c0_i32 = arith.constant 0 : i32
    %c0_i32_0 = arith.constant 0 : i32
    return %arg0, %c0_i32 : i32, i32
  }
}

</mosaic_0001>

<llo_original>
// kernel: ensemble_forward.1
$region0: #{ensemble_forward.1}
  #allocation0 [shape = 'u32[]', space=smem, size = 0x4, offset = 0x4, fixed_abs, tag = 'smem constant byte address 0x4 - core index']
  #allocation1 [shape = 'u32[144,128]{1,0:T(1,128)}', space=vmem, size = 0x12000, scoped, tag = 'internal scratch']
  %s0 = inlined_call_operand.vmem [shape: bf16[8,4], index: 0, kind: input, shape index: {}]
  %s1 = inlined_call_operand.vmem [shape: bf16[4,256], index: 1, kind: input, shape index: {}]
  %s2 = inlined_call_operand.vmem [shape: f32[1,256], index: 2, kind: input, shape index: {}]
  %s3 = inlined_call_operand.vmem [shape: bf16[256,128], index: 3, kind: input, shape index: {}]
  %s4 = inlined_call_operand.vmem [shape: f32[1,128], index: 4, kind: input, shape index: {}]
  %s5 = inlined_call_operand.vmem [shape: f32[8,128], index: 5, kind: output, shape index: {}]
  %s6 = sld [smem:[#allocation0]]
  $region30: #{ensemble_forward.1} parent=0
    _
  %s8 = ssub.s32 1, %s6
  %s9 = scalar_select 0, %s8, %s6
  // Predicated region
  $region2: #{ensemble_forward.1} parent=0 // pred_check
    _
  $region3: #{ensemble_forward.1} parent=0 // pred_check_branch
    %11 = sbr.rel (0) target = $region5
  $region4: #{ensemble_forward.1} parent=0 // pred_region
    _
  $region5: #{ensemble_forward.1} parent=0 // pred_fallthru
    _
  // Predicated region
  $region6: #{ensemble_forward.1} parent=0 // pred_check
    _
  $region7: #{ensemble_forward.1} parent=0 // pred_check_branch
    %13 = sbr.rel (0) target = $region9
  $region8: #{ensemble_forward.1} parent=0 // pred_region
    _
  $region9: #{ensemble_forward.1} parent=0 // pred_fallthru
    _
  // Predicated region
  $region10: #{ensemble_forward.1} parent=0 // pred_check
    _
  $region11: #{ensemble_forward.1} parent=0 // pred_check_branch
    %15 = sbr.rel (0) target = $region13
  $region12: #{ensemble_forward.1} parent=0 // pred_region
    _
  $region13: #{ensemble_forward.1} parent=0 // pred_fallthru
    _
  // Predicated region
  $region14: #{ensemble_forward.1} parent=0 // pred_check
    _
  $region15: #{ensemble_forward.1} parent=0 // pred_check_branch
    %17 = sbr.rel (0) target = $region17
  $region16: #{ensemble_forward.1} parent=0 // pred_region
    _
  $region17: #{ensemble_forward.1} parent=0 // pred_fallthru
    _
  // Predicated region
  $region18: #{ensemble_forward.1} parent=0 // pred_check
    _
  $region19: #{ensemble_forward.1} parent=0 // pred_check_branch
    %19 = sbr.rel (0) target = $region21
  $region20: #{ensemble_forward.1} parent=0 // pred_region
    _
  $region21: #{ensemble_forward.1} parent=0 // pred_fallthru
    _
  %v21 = vld [vmem:[%s0] sm:$0xf]
  %v22 = vld [vmem:[%s1] sm:$0xf]
  %v23 = vld [vmem:[%s2] sm:$0x3]
  %v25 = vlaneseq
  %v26 = vshrl.u32 %v25, 7
  %v27 = vsub.s32 0, %v26
  %v28 = vrot.slane %v23, %v27
  %v29 = vlaneseq
  %v30 = vshrl.u32 %v29, 7
  %v31 = vsub.s32 1, %v30
  %v32 = vrot.slane %v23, %v31
  %v37 = vunpack.c.l.s4 1983009808
  %v38 = vunpack.c.0.s8 %v37
  %v39 = vlaneseq
  %v40 = vshrl.u32 %v39, 7
  %v41 = vsub.s32 %v38, %v40
  %v42 = vrot.slane %v22, %v41
  %v43 = vcombine.high %v42, %v42
  %vm44 = vcmask 31744
  %v46 = vsel %vm44, %v21, 0
  %vm48 = vcmask 1041408
  %v50 = vsel %vm48, %v42, 0
  %v53 = vsel %vm48, %v43, 0
  %55 = vmatprep.subr.bf16.mxu0 0
  %56 = vmatpush1.bf16.msra.mxu0 0
  %57 = vmatprep.subr.bf16.mxu0 0
  %58 = vmatpush1.bf16.msra.mxu0 0
  %59 = vmatprep.subr.bf16.mxu0 0
  %60 = vmatpush1.bf16.msra.mxu0 0
  %61 = vmatprep.subr.bf16.mxu0 0
  %62 = vmatpush1.bf16.msra.mxu0 0
  %63 = vmatprep.subr.bf16.mxu0 0
  %64 = vmatpush1.bf16.msra.mxu0 0
  %65 = vmatprep.subr.bf16.mxu0 0
  %66 = vmatpush1.bf16.msra.mxu0 0
  %67 = vmatprep.subr.bf16.mxu0 0
  %68 = vmatpush1.bf16.msra.mxu0 0
  %69 = vmatprep.subr.bf16.mxu0 %v53
  %70 = vmatpush1.bf16.msra.mxu0 %v50
  %71 = vmatprep.subr.bf16.mxu0 0
  %72 = vmatpush2.bf16.msra.mxu0 0
  %73 = vmatprep.subr.bf16.mxu0 0
  %74 = vmatpush2.bf16.msra.mxu0 0
  %75 = vmatprep.subr.bf16.mxu0 0
  %76 = vmatpush2.bf16.msra.mxu0 0
  %77 = vmatprep.subr.bf16.mxu0 0
  %78 = vmatpush2.bf16.msra.mxu0 0
  %79 = vmatprep.subr.bf16.mxu0 0
  %80 = vmatpush2.bf16.msra.mxu0 0
  %81 = vmatprep.subr.bf16.mxu0 0
  %82 = vmatpush2.bf16.msra.mxu0 0
  %83 = vmatprep.subr.bf16.mxu0 0
  %84 = vmatpush2.bf16.msra.mxu0 0
  %85 = vmatprep.subr.bf16.mxu0 0
  %86 = vmatpush2.bf16.msra.mxu0 0
  %87 = vmatprep.mubr.bf16.mxu0 0
  %88 = vmatmul.mubr.bf16.gmra.mxu0 %v46
  %v89 = vpop.f32.mrf.mxu0
  %v90 = vadd.f32 %v28, %v89
  %v91 = vpop.f32.mrf.mxu0
  %v92 = vadd.f32 %v32, %v91
  %v93 = vpop.f32.mrf.mxu0
  %v94 = vpop.f32.mrf.mxu0
  %95 = vdwg.mxu0
  %v96 = vmax.f32 %v90, 0.0
  %v97 = vmax.f32 %v92, 0.0
  %v98 = vpack.c.bf16 %v96, %v96
  %v99 = vpack.c.bf16 %v97, %v97
  %v100 = vld [vmem:[%s3] sm:$0xf]
  %v101 = vld [vmem:[%s3 + $0x4] sm:$0xf]
  %v102 = vld [vmem:[%s3 + $0x8] sm:$0xf]
  %v103 = vld [vmem:[%s3 + $0xc] sm:$0xf]
  %v104 = vld [vmem:[%s3 + $0x10] sm:$0xf]
  %v105 = vld [vmem:[%s3 + $0x14] sm:$0xf]
  %v106 = vld [vmem:[%s3 + $0x18] sm:$0xf]
  %v107 = vld [vmem:[%s3 + $0x1c] sm:$0xf]
  %v108 = vld [vmem:[%s3 + $0x20] sm:$0xf]
  %v109 = vld [vmem:[%s3 + $0x24] sm:$0xf]
  %v110 = vld [vmem:[%s3 + $0x28] sm:$0xf]
  %v111 = vld [vmem:[%s3 + $0x2c] sm:$0xf]
  %v112 = vld [vmem:[%s3 + $0x30] sm:$0xf]
  %v113 = vld [vmem:[%s3 + $0x34] sm:$0xf]
  %v114 = vld [vmem:[%s3 + $0x38] sm:$0xf]
  %v115 = vld [vmem:[%s3 + $0x3c] sm:$0xf]
  %v116 = vld [vmem:[%s3 + $0x40] sm:$0xf]
  %v117 = vld [vmem:[%s3 + $0x44] sm:$0xf]
  %v118 = vld [vmem:[%s3 + $0x48] sm:$0xf]
  %v119 = vld [vmem:[%s3 + $0x4c] sm:$0xf]
  %v120 = vld [vmem:[%s3 + $0x50] sm:$0xf]
  %v121 = vld [vmem:[%s3 + $0x54] sm:$0xf]
  %v122 = vld [vmem:[%s3 + $0x58] sm:$0xf]
  %v123 = vld [vmem:[%s3 + $0x5c] sm:$0xf]
  %v124 = vld [vmem:[%s3 + $0x60] sm:$0xf]
  %v125 = vld [vmem:[%s3 + $0x64] sm:$0xf]
  %v126 = vld [vmem:[%s3 + $0x68] sm:$0xf]
  %v127 = vld [vmem:[%s3 + $0x6c] sm:$0xf]
  %v128 = vld [vmem:[%s3 + $0x70] sm:$0xf]
  %v129 = vld [vmem:[%s3 + $0x74] sm:$0xf]
  %v130 = vld [vmem:[%s3 + $0x78] sm:$0xf]
  %v131 = vld [vmem:[%s3 + $0x7c] sm:$0xf]
  %v132 = vld [vmem:[%s4] sm:$0x1]
  %v134 = vlaneseq
  %v135 = vshrl.u32 %v134, 7
  %v136 = vsub.s32 0, %v135
  %v137 = vrot.slane %v132, %v136
  %v171 = vunpack.c.l.b16 %v100
  %v172 = vunpack.c.l.b16 %v101
  %v173 = vunpack.c.l.b16 %v102
  %v174 = vunpack.c.l.b16 %v103
  %v175 = vunpack.c.l.b16 %v104
  %v176 = vunpack.c.l.b16 %v105
  %v177 = vunpack.c.l.b16 %v106
  %v178 = vunpack.c.l.b16 %v107
  %v179 = vunpack.c.l.b16 %v108
  %v180 = vunpack.c.l.b16 %v109
  %v181 = vunpack.c.l.b16 %v110
  %v182 = vunpack.c.l.b16 %v111
  %v183 = vunpack.c.l.b16 %v112
  %v184 = vunpack.c.l.b16 %v113
  %v185 = vunpack.c.l.b16 %v114
  %v186 = vunpack.c.l.b16 %v115
  %v187 = vunpack.c.l.b16 %v116
  %v188 = vunpack.c.l.b16 %v117
  %v189 = vunpack.c.l.b16 %v118
  %v190 = vunpack.c.l.b16 %v119
  %v191 = vunpack.c.l.b16 %v120
  %v192 = vunpack.c.l.b16 %v121
  %v193 = vunpack.c.l.b16 %v122
  %v194 = vunpack.c.l.b16 %v123
  %v195 = vunpack.c.l.b16 %v124
  %v196 = vunpack.c.l.b16 %v125
  %v197 = vunpack.c.l.b16 %v126
  %v198 = vunpack.c.l.b16 %v127
  %v199 = vunpack.c.l.b16 %v128
  %v200 = vunpack.c.l.b16 %v129
  %v201 = vunpack.c.l.b16 %v130
  %v202 = vunpack.c.l.b16 %v131
  %v203 = vpack.c.b16 %v172, %v171
  %v204 = vpack.c.b16 %v174, %v173
  %v205 = vpack.c.b16 %v176, %v175
  %v206 = vpack.c.b16 %v178, %v177
  %v207 = vpack.c.b16 %v180, %v179
  %v208 = vpack.c.b16 %v182, %v181
  %v209 = vpack.c.b16 %v184, %v183
  %v210 = vpack.c.b16 %v186, %v185
  %v211 = vpack.c.b16 %v188, %v187
  %v212 = vpack.c.b16 %v190, %v189
  %v213 = vpack.c.b16 %v192, %v191
  %v214 = vpack.c.b16 %v194, %v193
  %v215 = vpack.c.b16 %v196, %v195
  %v216 = vpack.c.b16 %v198, %v197
  %v217 = vpack.c.b16 %v200, %v199
  %v218 = vpack.c.b16 %v202, %v201
  %235 = vmatprep.subr.bf16.mxu0 0
  %236 = vmatpush1.bf16.msra.mxu0 %v210
  %237 = vmatprep.subr.bf16.mxu0 0
  %238 = vmatpush1.bf16.msra.mxu0 %v209
  %239 = vmatprep.subr.bf16.mxu0 0
  %240 = vmatpush1.bf16.msra.mxu0 %v208
  %241 = vmatprep.subr.bf16.mxu0 0
  %242 = vmatpush1.bf16.msra.mxu0 %v207
  %243 = vmatprep.subr.bf16.mxu0 0
  %244 = vmatpush1.bf16.msra.mxu0 %v206
  %245 = vmatprep.subr.bf16.mxu0 0
  %246 = vmatpush1.bf16.msra.mxu0 %v205
  %247 = vmatprep.subr.bf16.mxu0 0
  %248 = vmatpush1.bf16.msra.mxu0 %v204
  %249 = vmatprep.subr.bf16.mxu0 0
  %250 = vmatpush1.bf16.msra.mxu0 %v203
  %251 = vmatprep.subr.bf16.mxu0 0
  %252 = vmatpush2.bf16.msra.mxu0 %v218
  %253 = vmatprep.subr.bf16.mxu0 0
  %254 = vmatpush2.bf16.msra.mxu0 %v217
  %255 = vmatprep.subr.bf16.mxu0 0
  %256 = vmatpush2.bf16.msra.mxu0 %v216
  %257 = vmatprep.subr.bf16.mxu0 0
  %258 = vmatpush2.bf16.msra.mxu0 %v215
  %259 = vmatprep.subr.bf16.mxu0 0
  %260 = vmatpush2.bf16.msra.mxu0 %v214
  %261 = vmatprep.subr.bf16.mxu0 0
  %262 = vmatpush2.bf16.msra.mxu0 %v213
  %263 = vmatprep.subr.bf16.mxu0 0
  %264 = vmatpush2.bf16.msra.mxu0 %v212
  %265 = vmatprep.subr.bf16.mxu0 0
  %266 = vmatpush2.bf16.msra.mxu0 %v211
  %267 = vmatprep.mubr.bf16.mxu0 %v99
  %268 = vmatmul.mubr.bf16.gmra.mxu0 %v98
  %v269 = vpop.f32.mrf.mxu0
  %v270 = vadd.f32 %v137, %v269
  %v271 = vpop.f32.mrf.mxu0
  %v272 = vpop.f32.mrf.mxu0
  %v273 = vpop.f32.mrf.mxu0
  %274 = vdwg.mxu0
  %275 = vst [vmem:[%s5] sm:$0xff] %v270
  // Predicated region
  $region22: #{ensemble_forward.1} parent=0 // pred_check
    _
  $region23: #{ensemble_forward.1} parent=0 // pred_check_branch
    %277 = sbr.rel (0) target = $region25
  $region24: #{ensemble_forward.1} parent=0 // pred_region
    _
  $region25: #{ensemble_forward.1} parent=0 // pred_fallthru
    _
  // Predicated region
  $region26: #{ensemble_forward.1} parent=0 // pred_check
    _
  $region27: #{ensemble_forward.1} parent=0 // pred_check_branch
    %279 = sbr.rel (0) target = $region29
  $region28: #{ensemble_forward.1} parent=0 // pred_region
    _
  $region29: #{ensemble_forward.1} parent=0 // pred_fallthru
    _

</llo_original>
